<compile_context>
chip_gen: v6e
topology: v6e:2x2x1
jax: 0.10.0
libtpu: 0.0.40
codegen_flags: <defaults>
</compile_context>

<pallas_src>
import jax
import jax.numpy as jnp
from jax.experimental import pallas as pl
from jax.experimental.pallas import tpu as pltpu


def _conv_cal_kernel(x0_ref, x1_ref, x2_ref, wb_ref, bias_ref, v_ref, lb_ref, o_ref):
    """One batch tile.

    x*_ref  : [TB, E]        native-dtype VMEM   head / relation / tail embeddings
    wb_ref  : [3, E, C*E]    bf16 VMEM           banded conv weight (resident)
    bias_ref: [1, C*E]       f32  VMEM           conv bias, repeated per channel block
    v_ref   : [1, C*E]       f32  VMEM           classifier weight row
    lb_ref  : [1]            f32  SMEM           classifier bias
    o_ref   : [TB, 1]        f32  VMEM           scores
    """
    # bf16 operands for the MXU, f32 accumulation (casting in-kernel keeps HBM traffic
    # at the native input dtype and adds only a cheap VPU cast).
    x0 = x0_ref[...].astype(jnp.bfloat16)
    x1 = x1_ref[...].astype(jnp.bfloat16)
    x2 = x2_ref[...].astype(jnp.bfloat16)

    # conv[b, c*E+e] = sum_w sum_{dh} W[c,0,dh,w] * x_w[b, e+dh-1]  (zero padded)
    conv = jnp.dot(x0, wb_ref[0], preferred_element_type=jnp.float32)
    conv = conv + jnp.dot(x1, wb_ref[1], preferred_element_type=jnp.float32)
    conv = conv + jnp.dot(x2, wb_ref[2], preferred_element_type=jnp.float32)

    # Epilogue: bias + ReLU (dropout = identity, eval mode), classifier weights, reduce.
    h = jnp.maximum(conv + bias_ref[...], 0.0)
    weighted = h * v_ref[...]
    score = jnp.sum(weighted, axis=1, keepdims=True) + lb_ref[0]
    o_ref[...] = score.astype(o_ref.dtype)


def _ceil_div(a, b):
    return -(-a // b)


def _plan_batch(batch, cap=1024):
    """Return (padded_batch, batch_tile).

    - batch_tile is a multiple of 8 and <= cap (cap keeps the per-tile footprint,
      including the [tile, C*E] f32 intermediates, well inside even v5e's 16 MiB
      scoped-VMEM default).
    - padded_batch is a multiple of batch_tile (the wrapper zero-pads and slices),
      so awkward batch sizes never collapse to tiny tiles or a single huge block.
    - when batch >= 16 we force >= 2 grid steps so the parallel axis actually shards
      across both TensorCores on v7x.
    """
    pad8 = max(8, _ceil_div(batch, 8) * 8)
    n_tiles = _ceil_div(pad8, cap)
    if pad8 >= 16:
        n_tiles = max(n_tiles, 2)
    tile = _ceil_div(_ceil_div(pad8, n_tiles), 8) * 8
    return n_tiles * tile, tile


class ConvCal:
    """JAX/Pallas counterpart of the PyTorch Conv_cal module (eval mode)."""

    def __init__(self, emb_s, n, out_channels, dropout, key):
        self.emb_s = emb_s
        self.n = n                      # stored for parity; unused in forward
        self.out_channels = out_channels
        self.dropout = dropout
        # TODO(synk): nn.Dropout is implemented as identity (eval mode); train-mode
        # stochastic masking (pltpu.prng_*) is not implemented.

        C, E = out_channels, emb_s
        kw, kb, kc, kcb = jax.random.split(key, 4)
        gain = 1.414
        b_conv = gain * (6.0 / (1 * 3 * 3 + C * 3 * 3)) ** 0.5
        self.conv_w = jax.random.uniform(kw, (C, 1, 3, 3), jnp.float32, -b_conv, b_conv)
        self.conv_b = jax.random.uniform(kb, (C,), jnp.float32, -1.0 / 3.0, 1.0 / 3.0)
        b_clf = gain * (6.0 / (C * E + 1)) ** 0.5
        self.clf_w = jax.random.uniform(kc, (1, C * E), jnp.float32, -b_clf, b_clf)
        b_bias = 1.0 / (C * E) ** 0.5
        self.clf_b = jax.random.uniform(kcb, (1,), jnp.float32, -b_bias, b_bias)

        # ---- Precomputed kernel-side parameters (done once, not per call) ----------
        # Banded weight: Wband[w, ee, c*E+e] = conv_w[c, 0, (ee-e)+1, w] for |ee-e| <= 1.
        # S[dh][ee, e] = 1 iff ee == e + dh - 1  (shift matrices; zero-padding implicit).
        S = [jnp.eye(E, k=1 - dh, dtype=jnp.float32) for dh in range(3)]
        slabs = []
        for w in range(3):
            cols = []
            for c in range(C):
                blk = (self.conv_w[c, 0, 0, w] * S[0]
                       + self.conv_w[c, 0, 1, w] * S[1]
                       + self.conv_w[c, 0, 2, w] * S[2])
                cols.append(blk)                      # [E, E]
            slabs.append(jnp.concatenate(cols, axis=1))  # [E, C*E]
        self._wband = jnp.stack(slabs, axis=0).astype(jnp.bfloat16)   # [3, E, C*E]
        self._bias_row = jnp.repeat(self.conv_b, E).reshape(1, C * E)  # f32 [1, C*E]
        self._v_row = self.clf_w.reshape(1, C * E)                     # f32 [1, C*E]

    def __call__(self, x0, x1, x2, rel):
        # x0/x1/x2: [B, 1, E].  `rel` is accepted but unused, as in the reference.
        B = x0.shape[0]
        E, C = self.emb_s, self.out_channels
        # Keep native dtype (no wrapper-side f32 cast: input DMA is the only HBM traffic).
        x0 = x0.reshape(B, E)
        x1 = x1.reshape(B, E)
        x2 = x2.reshape(B, E)

        padded_b, tb = _plan_batch(B)
        if padded_b != B:
            pad = ((0, padded_b - B), (0, 0))
            x0 = jnp.pad(x0, pad)
            x1 = jnp.pad(x1, pad)
            x2 = jnp.pad(x2, pad)
        grid = (padded_b // tb,)

        emb_spec = pl.BlockSpec((tb, E), lambda i: (i, 0))
        row_spec = pl.BlockSpec((1, C * E), lambda i: (0, 0))      # resident
        smem_spec = pl.BlockSpec(memory_space=pltpu.MemorySpace.SMEM)

        out = pl.pallas_call(
            _conv_cal_kernel,
            out_shape=jax.ShapeDtypeStruct((padded_b, 1), jnp.float32),
            grid=grid,
            in_specs=[
                emb_spec, emb_spec, emb_spec,
                pl.BlockSpec((3, E, C * E), lambda i: (0, 0, 0)),  # banded W, resident
                row_spec,                                          # conv bias row
                row_spec,                                          # classifier W row
                smem_spec,                                         # classifier bias [1]
            ],
            out_specs=pl.BlockSpec((tb, 1), lambda i: (i, 0)),
            compiler_params=pltpu.CompilerParams(
                dimension_semantics=("parallel",),
                vmem_limit_bytes=32 * 1024 * 1024,
            ),
        )(x0, x1, x2, self._wband, self._bias_row, self._v_row, self.clf_b)
        return out[:B]


def _reference(x0, x1, x2, rel, conv_w, conv_b, clf_w, clf_b):
    # Pure-JAX mirror of the PyTorch forward (eval-mode dropout). x*: [B, 1, E].
    B = x0.shape[0]
    x = jnp.concatenate([x0, x1, x2], axis=1)            # [B, 3, E]
    conv_input = jnp.transpose(x, (0, 2, 1))[:, None]    # [B, 1, E, 3]
    out = jax.lax.conv_general_dilated(
        conv_input, conv_w, window_strides=(1, 1), padding=((1, 1), (0, 0)),
        dimension_numbers=("NCHW", "OIHW", "NCHW"))
    out = out + conv_b[None, :, None, None]
    h = jnp.maximum(out, 0.0)                            # ReLU; dropout = identity
    flat = h.reshape(B, -1)
    return flat @ clf_w.T + clf_b


if __name__ == "__main__":
    key = jax.random.PRNGKey(0)
    k0, k1, k2, kr, kmodel = jax.random.split(key, 5)

    batch, emb_s, out_channels = 8, 128, 4
    model = ConvCal(emb_s=emb_s, n=0, out_channels=out_channels, dropout=0.0, key=kmodel)

    x0 = jax.random.normal(k0, (batch, 1, emb_s), dtype=jnp.float32)
    x1 = jax.random.normal(k1, (batch, 1, emb_s), dtype=jnp.float32)
    x2 = jax.random.normal(k2, (batch, 1, emb_s), dtype=jnp.float32)
    rel = jax.random.normal(kr, (batch, 1, emb_s), dtype=jnp.float32)  # unused

    score = jax.block_until_ready(model(x0, x1, x2, rel))
    ref = _reference(x0, x1, x2, rel, model.conv_w, model.conv_b,
                     model.clf_w, model.clf_b)

    # bf16 MXU operands with f32 accumulation -> tolerance loosened vs the pure-f32 path.
    if score.shape == (batch, 1) and jnp.allclose(score, ref, atol=5e-2, rtol=5e-2):
        print("KERNEL_OK")
</pallas_src>

<mosaic_0001>
module attributes {stable_mosaic.version = 11 : i64} {
  func.func @_conv_cal_kernel(%arg0: i32, %arg1: memref<8x128xf32, #tpu.memory_space<vmem>>, %arg2: memref<8x128xf32, #tpu.memory_space<vmem>>, %arg3: memref<8x128xf32, #tpu.memory_space<vmem>>, %arg4: memref<3x128x512xbf16, #tpu.memory_space<vmem>>, %arg5: memref<1x512xf32, #tpu.memory_space<vmem>>, %arg6: memref<1x512xf32, #tpu.memory_space<vmem>>, %arg7: memref<1xf32, #tpu.memory_space<smem>>, %arg8: memref<8x1xf32, #tpu.memory_space<vmem>>) attributes {dimension_semantics = [#tpu.dimension_semantics<parallel>], iteration_bounds = array<i64: 1>, scalar_prefetch = 0 : i64, scratch_operands = 0 : i64, tpu.core_type = #tpu.core_type<tc>, window_params = [{transform_indices = @transform_0, window_bounds = array<i64: 8, 128>}, {transform_indices = @transform_1, window_bounds = array<i64: 8, 128>}, {transform_indices = @transform_2, window_bounds = array<i64: 8, 128>}, {pipeline_mode = #tpu.pipeline_mode<synchronous>, transform_indices = @transform_3, window_bounds = array<i64: 3, 128, 512>}, {pipeline_mode = #tpu.pipeline_mode<synchronous>, transform_indices = @transform_4, window_bounds = array<i64: 1, 512>}, {pipeline_mode = #tpu.pipeline_mode<synchronous>, transform_indices = @transform_5, window_bounds = array<i64: 1, 512>}, {transform_indices = @transform_6, window_bounds = array<i64: 1>}, {transform_indices = @transform_7, window_bounds = array<i64: 8, 1>}]} {
    %c0 = arith.constant 0 : index
    %c0_0 = arith.constant 0 : index
    %0 = vector.load %arg1[%c0, %c0_0] : memref<8x128xf32, #tpu.memory_space<vmem>>, vector<8x128xf32>
    %1 = arith.truncf %0 : vector<8x128xf32> to vector<8x128xbf16>
    %c0_1 = arith.constant 0 : index
    %c0_2 = arith.constant 0 : index
    %2 = vector.load %arg2[%c0_1, %c0_2] : memref<8x128xf32, #tpu.memory_space<vmem>>, vector<8x128xf32>
    %3 = arith.truncf %2 : vector<8x128xf32> to vector<8x128xbf16>
    %c0_3 = arith.constant 0 : index
    %c0_4 = arith.constant 0 : index
    %4 = vector.load %arg3[%c0_3, %c0_4] : memref<8x128xf32, #tpu.memory_space<vmem>>, vector<8x128xf32>
    %5 = arith.truncf %4 : vector<8x128xf32> to vector<8x128xbf16>
    %c0_5 = arith.constant 0 : index
    %c0_6 = arith.constant 0 : index
    %c0_7 = arith.constant 0 : index
    %6 = vector.load %arg4[%c0_5, %c0_6, %c0_7] : memref<3x128x512xbf16, #tpu.memory_space<vmem>>, vector<1x128x512xbf16>
    %7 = vector.shape_cast %6 : vector<1x128x512xbf16> to vector<128x512xbf16>
    %cst = arith.constant dense<0.000000e+00> : vector<8x512xf32>
    %8 = tpu.matmul %1, %7, %cst {dimension_numbers = #tpu.dot_dimension_numbers<[1], [0], [0], [1], [0, 0, 1, 1], [], []>} : vector<8x128xbf16>, vector<128x512xbf16>, vector<8x512xf32> -> vector<8x512xf32>
    %c1 = arith.constant 1 : index
    %c0_8 = arith.constant 0 : index
    %c0_9 = arith.constant 0 : index
    %9 = vector.load %arg4[%c1, %c0_8, %c0_9] : memref<3x128x512xbf16, #tpu.memory_space<vmem>>, vector<1x128x512xbf16>
    %10 = vector.shape_cast %9 : vector<1x128x512xbf16> to vector<128x512xbf16>
    %cst_10 = arith.constant dense<0.000000e+00> : vector<8x512xf32>
    %11 = tpu.matmul %3, %10, %cst_10 {dimension_numbers = #tpu.dot_dimension_numbers<[1], [0], [0], [1], [0, 0, 1, 1], [], []>} : vector<8x128xbf16>, vector<128x512xbf16>, vector<8x512xf32> -> vector<8x512xf32>
    %12 = arith.addf %8, %11 : vector<8x512xf32>
    %c2 = arith.constant 2 : index
    %c0_11 = arith.constant 0 : index
    %c0_12 = arith.constant 0 : index
    %13 = vector.load %arg4[%c2, %c0_11, %c0_12] : memref<3x128x512xbf16, #tpu.memory_space<vmem>>, vector<1x128x512xbf16>
    %14 = vector.shape_cast %13 : vector<1x128x512xbf16> to vector<128x512xbf16>
    %cst_13 = arith.constant dense<0.000000e+00> : vector<8x512xf32>
    %15 = tpu.matmul %5, %14, %cst_13 {dimension_numbers = #tpu.dot_dimension_numbers<[1], [0], [0], [1], [0, 0, 1, 1], [], []>} : vector<8x128xbf16>, vector<128x512xbf16>, vector<8x512xf32> -> vector<8x512xf32>
    %16 = arith.addf %12, %15 : vector<8x512xf32>
    %c0_14 = arith.constant 0 : index
    %c0_15 = arith.constant 0 : index
    %17 = vector.load %arg5[%c0_14, %c0_15] : memref<1x512xf32, #tpu.memory_space<vmem>>, vector<1x512xf32>
    %18 = vector.broadcast %17 : vector<1x512xf32> to vector<8x512xf32>
    %19 = arith.addf %16, %18 : vector<8x512xf32>
    %cst_16 = arith.constant 0.000000e+00 : f32
    %20 = vector.broadcast %cst_16 : f32 to vector<8x512xf32>
    %21 = arith.maximumf %19, %20 : vector<8x512xf32>
    %c0_17 = arith.constant 0 : index
    %c0_18 = arith.constant 0 : index
    %22 = vector.load %arg6[%c0_17, %c0_18] : memref<1x512xf32, #tpu.memory_space<vmem>>, vector<1x512xf32>
    %23 = vector.broadcast %22 : vector<1x512xf32> to vector<8x512xf32>
    %24 = arith.mulf %21, %23 : vector<8x512xf32>
    %cst_19 = arith.constant dense<0.000000e+00> : vector<8xf32>
    %25 = vector.multi_reduction <add>, %24, %cst_19 [1] : vector<8x512xf32> to vector<8xf32>
    %26 = vector.shape_cast %25 : vector<8xf32> to vector<8x1xf32>
    %c0_20 = arith.constant 0 : index
    %27 = memref.load %arg7[%c0_20] : memref<1xf32, #tpu.memory_space<smem>>
    %28 = vector.broadcast %27 : f32 to vector<8x1xf32>
    %29 = arith.addf %26, %28 : vector<8x1xf32>
    %c0_21 = arith.constant 0 : index
    %c0_22 = arith.constant 0 : index
    %30 = vector.load %arg8[%c0_21, %c0_22] : memref<8x1xf32, #tpu.memory_space<vmem>>, vector<8x1xf32>
    tpu.vector_store %arg8[%c0_21, %c0_22], %29 {strides = array<i32>} : memref<8x1xf32, #tpu.memory_space<vmem>>, vector<8x1xf32>,
    return
  }
  func.func @transform_0(%arg0: i32) -> (i32, i32) {
    %c0_i32 = arith.constant 0 : i32
    %c0_i32_0 = arith.constant 0 : i32
    return %arg0, %c0_i32 : i32, i32
  }
  func.func @transform_1(%arg0: i32) -> (i32, i32) {
    %c0_i32 = arith.constant 0 : i32
    %c0_i32_0 = arith.constant 0 : i32
    return %arg0, %c0_i32 : i32, i32
  }
  func.func @transform_2(%arg0: i32) -> (i32, i32) {
    %c0_i32 = arith.constant 0 : i32
    %c0_i32_0 = arith.constant 0 : i32
    return %arg0, %c0_i32 : i32, i32
  }
  func.func @transform_3(%arg0: i32) -> (i32, i32, i32) {
    %c0_i32 = arith.constant 0 : i32
    %c0_i32_0 = arith.constant 0 : i32
    %c0_i32_1 = arith.constant 0 : i32
    %c0_i32_2 = arith.constant 0 : i32
    return %c0_i32, %c0_i32_0, %c0_i32_1 : i32, i32, i32
  }
  func.func @transform_4(%arg0: i32) -> (i32, i32) {
    %c0_i32 = arith.constant 0 : i32
    %c0_i32_0 = arith.constant 0 : i32
    %c0_i32_1 = arith.constant 0 : i32
    return %c0_i32, %c0_i32_0 : i32, i32
  }
  func.func @transform_5(%arg0: i32) -> (i32, i32) {
    %c0_i32 = arith.constant 0 : i32
    %c0_i32_0 = arith.constant 0 : i32
    %c0_i32_1 = arith.constant 0 : i32
    return %c0_i32, %c0_i32_0 : i32, i32
  }
  func.func @transform_6(%arg0: i32) -> i32 {
    %c0_i32 = arith.constant 0 : i32
    %c0_i32_0 = arith.constant 0 : i32
    return %c0_i32 : i32
  }
  func.func @transform_7(%arg0: i32) -> (i32, i32) {
    %c0_i32 = arith.constant 0 : i32
    %c0_i32_0 = arith.constant 0 : i32
    return %arg0, %c0_i32 : i32, i32
  }
}

</mosaic_0001>

<llo_original>
// kernel: tpu_custom_call.1
$region0: #{tpu_custom_call.1}
  #allocation0 [shape = 'u32[]', space=smem, size = 0x4, offset = 0x4, fixed_abs, tag = 'smem constant byte address 0x4 - core index']
  #allocation1 [shape = 'u32[144,128]{1,0:T(1,128)}', space=vmem, size = 0x12000, scoped, tag = 'internal scratch']
  #allocation2 [shape = 'f32[1]{0:T(128)S(6)}', space=smem, size = 0x200, scoped, tag = 'scoped memory for tpu_custom_call.1']
  %s0 = inlined_call_operand.hbm [shape: f32[8,128], index: 0, kind: input, shape index: {}]
  %s1 = inlined_call_operand.hbm [shape: f32[8,128], index: 1, kind: input, shape index: {}]
  %s2 = inlined_call_operand.hbm [shape: f32[8,128], index: 2, kind: input, shape index: {}]
  %s3 = inlined_call_operand.hbm [shape: bf16[3,128,512], index: 3, kind: input, shape index: {}]
  %s4 = inlined_call_operand.vmem [shape: f32[1,512], index: 4, kind: input, shape index: {}]
  %s5 = inlined_call_operand.vmem [shape: f32[1,512], index: 5, kind: input, shape index: {}]
  %s6 = inlined_call_operand.<no memory space> [shape: f32[1], index: 6, kind: input, shape index: {}]
  %s7 = inlined_call_operand.vmem [shape: f32[8,1], index: 7, kind: output, shape index: {}]
  %s8 = sld [smem:[#allocation0]]
  $region54: #{tpu_custom_call.1} parent=0
    _
  %s10 = ssub.s32 1, %s8
  %s11 = scalar_select 0, %s10, %s8
  %12 = sst [smem:[#allocation2]] %s6
  $region1: #{tpu_custom_call.1} parent=0
    #allocation3 [shape = 'u8[4096]{0}', space=vmem, size = 0x1000, scoped, tag = 'input window, operand 0, single buffered']
    #allocation4 [shape = 's32[1]{0}', space=sflag, size = 0x4, scoped, tag = 'scoped memory for tpu_custom_call.1']
    #allocation5 [shape = 'u8[4096]{0}', space=vmem, size = 0x1000, scoped, tag = 'input window, operand 1, single buffered']
    #allocation6 [shape = 's32[1]{0}', space=sflag, size = 0x4, scoped, tag = 'scoped memory for tpu_custom_call.1']
    #allocation7 [shape = 'u8[4096]{0}', space=vmem, size = 0x1000, scoped, tag = 'input window, operand 2, single buffered']
    #allocation8 [shape = 'u8[393216]{0}', space=vmem, size = 0x60000, scoped, tag = 'input window, operand 3, single buffered']
    #allocation9 [shape = 's32[1]{0}', space=sflag, size = 0x4, scoped, tag = 'scoped memory for tpu_custom_call.1']
    %13 = vsyncpa [#allocation4], 0
    %14 = vsyncpa [#allocation6], 0
    %15 = vsyncpa [#allocation9], 0
    // Predicated region
    $region2: #{tpu_custom_call.1} parent=1 // pred_check
      _
    $region3: #{tpu_custom_call.1} parent=1 // pred_check_branch
      %17 = sbr.rel (0) target = $region5
    $region4: #{tpu_custom_call.1} parent=1 // pred_region
      %s19 = ssub.s32 128, 128
      %20 = vsyncadd [#allocation4], %s19
      %s22 = sshll.u32 [#allocation3], 4
      %s23 = int_to_ptr.vmem [resolvable:$true] %s22
      %25 = dma.hbm_to_vmem [thread:$0]  %s0, 128, %s23, [#allocation4]
    $region5: #{tpu_custom_call.1} parent=1 // pred_fallthru
      _
    // Predicated region
    $region6: #{tpu_custom_call.1} parent=1 // pred_check
      _
    $region7: #{tpu_custom_call.1} parent=1 // pred_check_branch
      %27 = sbr.rel (0) target = $region9
    $region8: #{tpu_custom_call.1} parent=1 // pred_region
      %s29 = ssub.s32 128, 128
      %30 = vsyncadd [#allocation6], %s29
      %s32 = sshll.u32 [#allocation5], 4
      %s33 = int_to_ptr.vmem [resolvable:$true] %s32
      %35 = dma.hbm_to_vmem [thread:$0]  %s1, 128, %s33, [#allocation6]
    $region9: #{tpu_custom_call.1} parent=1 // pred_fallthru
      _
    // Predicated region
    $region10: #{tpu_custom_call.1} parent=1 // pred_check
      _
    $region11: #{tpu_custom_call.1} parent=1 // pred_check_branch
      %37 = sbr.rel (0) target = $region13
    $region12: #{tpu_custom_call.1} parent=1 // pred_region
      %s39 = ssub.s32 128, 128
      %40 = vsyncadd [#allocation6], %s39
      %s42 = sshll.u32 [#allocation7], 4
      %s43 = int_to_ptr.vmem [resolvable:$true] %s42
      %45 = dma.hbm_to_vmem [thread:$0]  %s2, 128, %s43, [#allocation6]
    $region13: #{tpu_custom_call.1} parent=1 // pred_fallthru
      _
    // Predicated region
    $region14: #{tpu_custom_call.1} parent=1 // pred_check
      _
    $region15: #{tpu_custom_call.1} parent=1 // pred_check_branch
      %47 = sbr.rel (0) target = $region17
    $region16: #{tpu_custom_call.1} parent=1 // pred_region
      %s49 = ssub.s32 12288, 12288
      %50 = vsyncadd [#allocation9], %s49
      %s51 = sshll.u32 [#allocation8], 4
      %s52 = int_to_ptr.vmem [resolvable:$true] %s51
      %57 = dma.hbm_to_vmem [thread:$0]  %s3, 12288, %s52, [#allocation9], 256, 256, 16
    $region17: #{tpu_custom_call.1} parent=1 // pred_fallthru
      _
    // Predicated region
    $region18: #{tpu_custom_call.1} parent=1 // pred_check
      _
    $region19: #{tpu_custom_call.1} parent=1 // pred_check_branch
      %59 = sbr.rel (0) target = $region21
    $region20: #{tpu_custom_call.1} parent=1 // pred_region
      _
    $region21: #{tpu_custom_call.1} parent=1 // pred_fallthru
      _
    // Predicated region
    $region22: #{tpu_custom_call.1} parent=1 // pred_check
      _
    $region23: #{tpu_custom_call.1} parent=1 // pred_check_branch
      %61 = sbr.rel (0) target = $region25
    $region24: #{tpu_custom_call.1} parent=1 // pred_region
      _
    $region25: #{tpu_custom_call.1} parent=1 // pred_fallthru
      _
    // Predicated region
    $region26: #{tpu_custom_call.1} parent=1 // pred_check
      _
    $region27: #{tpu_custom_call.1} parent=1 // pred_check_branch
      %63 = sbr.rel (0) target = $region29
    $region28: #{tpu_custom_call.1} parent=1 // pred_region
      _
    $region29: #{tpu_custom_call.1} parent=1 // pred_fallthru
      _
    // Predicated region
    $region30: #{tpu_custom_call.1} parent=1 // pred_check
      _
    $region31: #{tpu_custom_call.1} parent=1 // pred_check_branch
      %65 = sbr.rel (0) target = $region33
    $region32: #{tpu_custom_call.1} parent=1 // pred_region
      %66 = dma.done [#allocation4], 128
    $region33: #{tpu_custom_call.1} parent=1 // pred_fallthru
      _
    // Predicated region
    $region34: #{tpu_custom_call.1} parent=1 // pred_check
      _
    $region35: #{tpu_custom_call.1} parent=1 // pred_check_branch
      %68 = sbr.rel (0) target = $region37
    $region36: #{tpu_custom_call.1} parent=1 // pred_region
      %69 = dma.done [#allocation6], 128
    $region37: #{tpu_custom_call.1} parent=1 // pred_fallthru
      _
    // Predicated region
    $region38: #{tpu_custom_call.1} parent=1 // pred_check
      _
    $region39: #{tpu_custom_call.1} parent=1 // pred_check_branch
      %71 = sbr.rel (0) target = $region41
    $region40: #{tpu_custom_call.1} parent=1 // pred_region
      %72 = dma.done [#allocation6], 128
    $region41: #{tpu_custom_call.1} parent=1 // pred_fallthru
      _
    // Predicated region
    $region42: #{tpu_custom_call.1} parent=1 // pred_check
      _
    $region43: #{tpu_custom_call.1} parent=1 // pred_check_branch
      %74 = sbr.rel (0) target = $region45
    $region44: #{tpu_custom_call.1} parent=1 // pred_region
      %75 = dma.done [#allocation9], 12288
    $region45: #{tpu_custom_call.1} parent=1 // pred_fallthru
      _
    %v77 = vld [vmem:[#allocation3] sm:$0xff]
    %v78 = vpack.c.bf16 %v77, %v77
    %v79 = vld [vmem:[#allocation5] sm:$0xff]
    %v80 = vpack.c.bf16 %v79, %v79
    %v81 = vld [vmem:[#allocation7] sm:$0xff]
    %v82 = vpack.c.bf16 %v81, %v81
    %v83 = vld [vmem:[#allocation8] sm:$0xff]
    %v84 = vld [vmem:[#allocation8 + $0x8] sm:$0xff]
    %v85 = vld [vmem:[#allocation8 + $0x10] sm:$0xff]
    %v86 = vld [vmem:[#allocation8 + $0x18] sm:$0xff]
    %v87 = vld [vmem:[#allocation8 + $0x20] sm:$0xff]
    %v88 = vld [vmem:[#allocation8 + $0x28] sm:$0xff]
    %v89 = vld [vmem:[#allocation8 + $0x30] sm:$0xff]
    %v90 = vld [vmem:[#allocation8 + $0x38] sm:$0xff]
    %v91 = vld [vmem:[#allocation8 + $0x40] sm:$0xff]
    %v92 = vld [vmem:[#allocation8 + $0x48] sm:$0xff]
    %v93 = vld [vmem:[#allocation8 + $0x50] sm:$0xff]
    %v94 = vld [vmem:[#allocation8 + $0x58] sm:$0xff]
    %v95 = vld [vmem:[#allocation8 + $0x60] sm:$0xff]
    %v96 = vld [vmem:[#allocation8 + $0x68] sm:$0xff]
    %v97 = vld [vmem:[#allocation8 + $0x70] sm:$0xff]
    %v98 = vld [vmem:[#allocation8 + $0x78] sm:$0xff]
    %v99 = vld [vmem:[#allocation8 + $0x80] sm:$0xff]
    %v100 = vld [vmem:[#allocation8 + $0x88] sm:$0xff]
    %v101 = vld [vmem:[#allocation8 + $0x90] sm:$0xff]
    %v102 = vld [vmem:[#allocation8 + $0x98] sm:$0xff]
    %v103 = vld [vmem:[#allocation8 + $0xa0] sm:$0xff]
    %v104 = vld [vmem:[#allocation8 + $0xa8] sm:$0xff]
    %v105 = vld [vmem:[#allocation8 + $0xb0] sm:$0xff]
    %v106 = vld [vmem:[#allocation8 + $0xb8] sm:$0xff]
    %v107 = vld [vmem:[#allocation8 + $0xc0] sm:$0xff]
    %v108 = vld [vmem:[#allocation8 + $0xc8] sm:$0xff]
    %v109 = vld [vmem:[#allocation8 + $0xd0] sm:$0xff]
    %v110 = vld [vmem:[#allocation8 + $0xd8] sm:$0xff]
    %v111 = vld [vmem:[#allocation8 + $0xe0] sm:$0xff]
    %v112 = vld [vmem:[#allocation8 + $0xe8] sm:$0xff]
    %v113 = vld [vmem:[#allocation8 + $0xf0] sm:$0xff]
    %v114 = vld [vmem:[#allocation8 + $0xf8] sm:$0xff]
    %s115 = scalar_lea.vmem [#allocation8], 256
    %v116 = vld [vmem:[%s115] sm:$0xff]
    %v117 = vld [vmem:[%s115 + $0x8] sm:$0xff]
    %v118 = vld [vmem:[%s115 + $0x10] sm:$0xff]
    %v119 = vld [vmem:[%s115 + $0x18] sm:$0xff]
    %v120 = vld [vmem:[%s115 + $0x20] sm:$0xff]
    %v121 = vld [vmem:[%s115 + $0x28] sm:$0xff]
    %v122 = vld [vmem:[%s115 + $0x30] sm:$0xff]
    %v123 = vld [vmem:[%s115 + $0x38] sm:$0xff]
    %v124 = vld [vmem:[%s115 + $0x40] sm:$0xff]
    %v125 = vld [vmem:[%s115 + $0x48] sm:$0xff]
    %v126 = vld [vmem:[%s115 + $0x50] sm:$0xff]
    %v127 = vld [vmem:[%s115 + $0x58] sm:$0xff]
    %v128 = vld [vmem:[%s115 + $0x60] sm:$0xff]
    %v129 = vld [vmem:[%s115 + $0x68] sm:$0xff]
    %v130 = vld [vmem:[%s115 + $0x70] sm:$0xff]
    %v131 = vld [vmem:[%s115 + $0x78] sm:$0xff]
    %v132 = vld [vmem:[%s115 + $0x80] sm:$0xff]
    %v133 = vld [vmem:[%s115 + $0x88] sm:$0xff]
    %v134 = vld [vmem:[%s115 + $0x90] sm:$0xff]
    %v135 = vld [vmem:[%s115 + $0x98] sm:$0xff]
    %v136 = vld [vmem:[%s115 + $0xa0] sm:$0xff]
    %v137 = vld [vmem:[%s115 + $0xa8] sm:$0xff]
    %v138 = vld [vmem:[%s115 + $0xb0] sm:$0xff]
    %v139 = vld [vmem:[%s115 + $0xb8] sm:$0xff]
    %v140 = vld [vmem:[%s115 + $0xc0] sm:$0xff]
    %v141 = vld [vmem:[%s115 + $0xc8] sm:$0xff]
    %v142 = vld [vmem:[%s115 + $0xd0] sm:$0xff]
    %v143 = vld [vmem:[%s115 + $0xd8] sm:$0xff]
    %v144 = vld [vmem:[%s115 + $0xe0] sm:$0xff]
    %v145 = vld [vmem:[%s115 + $0xe8] sm:$0xff]
    %v146 = vld [vmem:[%s115 + $0xf0] sm:$0xff]
    %v147 = vld [vmem:[%s115 + $0xf8] sm:$0xff]
    %v180 = vunpack.c.l.b16 %v116
    %v181 = vunpack.c.h.b16 %v116
    %v182 = vunpack.c.l.b16 %v117
    %v183 = vunpack.c.h.b16 %v117
    %v184 = vunpack.c.l.b16 %v118
    %v185 = vunpack.c.h.b16 %v118
    %v186 = vunpack.c.l.b16 %v119
    %v187 = vunpack.c.h.b16 %v119
    %v188 = vunpack.c.l.b16 %v120
    %v189 = vunpack.c.h.b16 %v120
    %v190 = vunpack.c.l.b16 %v121
    %v191 = vunpack.c.h.b16 %v121
    %v192 = vunpack.c.l.b16 %v122
    %v193 = vunpack.c.h.b16 %v122
    %v194 = vunpack.c.l.b16 %v123
    %v195 = vunpack.c.h.b16 %v123
    %v196 = vunpack.c.l.b16 %v124
    %v197 = vunpack.c.h.b16 %v124
    %v198 = vunpack.c.l.b16 %v125
    %v199 = vunpack.c.h.b16 %v125
    %v200 = vunpack.c.l.b16 %v126
    %v201 = vunpack.c.h.b16 %v126
    %v202 = vunpack.c.l.b16 %v127
    %v203 = vunpack.c.h.b16 %v127
    %v204 = vunpack.c.l.b16 %v128
    %v205 = vunpack.c.h.b16 %v128
    %v206 = vunpack.c.l.b16 %v129
    %v207 = vunpack.c.h.b16 %v129
    %v208 = vunpack.c.l.b16 %v130
    %v209 = vunpack.c.h.b16 %v130
    %v210 = vunpack.c.l.b16 %v131
    %v211 = vunpack.c.h.b16 %v131
    %v212 = vunpack.c.l.b16 %v132
    %v213 = vunpack.c.h.b16 %v132
    %v214 = vunpack.c.l.b16 %v133
    %v215 = vunpack.c.h.b16 %v133
    %v216 = vunpack.c.l.b16 %v134
    %v217 = vunpack.c.h.b16 %v134
    %v218 = vunpack.c.l.b16 %v135
    %v219 = vunpack.c.h.b16 %v135
    %v220 = vunpack.c.l.b16 %v136
    %v221 = vunpack.c.h.b16 %v136
    %v222 = vunpack.c.l.b16 %v137
    %v223 = vunpack.c.h.b16 %v137
    %v224 = vunpack.c.l.b16 %v138
    %v225 = vunpack.c.h.b16 %v138
    %v226 = vunpack.c.l.b16 %v139
    %v227 = vunpack.c.h.b16 %v139
    %v228 = vunpack.c.l.b16 %v140
    %v229 = vunpack.c.h.b16 %v140
    %v230 = vunpack.c.l.b16 %v141
    %v231 = vunpack.c.h.b16 %v141
    %v232 = vunpack.c.l.b16 %v142
    %v233 = vunpack.c.h.b16 %v142
    %v234 = vunpack.c.l.b16 %v143
    %v235 = vunpack.c.h.b16 %v143
    %v236 = vunpack.c.l.b16 %v144
    %v237 = vunpack.c.h.b16 %v144
    %v238 = vunpack.c.l.b16 %v145
    %v239 = vunpack.c.h.b16 %v145
    %v240 = vunpack.c.l.b16 %v146
    %v241 = vunpack.c.h.b16 %v146
    %v242 = vunpack.c.l.b16 %v147
    %v243 = vunpack.c.h.b16 %v147
    %v244 = vpack.c.b16 %v184, %v180
    %v245 = vpack.c.b16 %v185, %v181
    %v246 = vpack.c.b16 %v186, %v182
    %v247 = vpack.c.b16 %v187, %v183
    %v248 = vpack.c.b16 %v192, %v188
    %v249 = vpack.c.b16 %v193, %v189
    %v250 = vpack.c.b16 %v194, %v190
    %v251 = vpack.c.b16 %v195, %v191
    %v252 = vpack.c.b16 %v200, %v196
    %v253 = vpack.c.b16 %v201, %v197
    %v254 = vpack.c.b16 %v202, %v198
    %v255 = vpack.c.b16 %v203, %v199
    %v256 = vpack.c.b16 %v208, %v204
    %v257 = vpack.c.b16 %v209, %v205
    %v258 = vpack.c.b16 %v210, %v206
    %v259 = vpack.c.b16 %v211, %v207
    %v260 = vpack.c.b16 %v216, %v212
    %v261 = vpack.c.b16 %v217, %v213
    %v262 = vpack.c.b16 %v218, %v214
    %v263 = vpack.c.b16 %v219, %v215
    %v264 = vpack.c.b16 %v224, %v220
    %v265 = vpack.c.b16 %v225, %v221
    %v266 = vpack.c.b16 %v226, %v222
    %v267 = vpack.c.b16 %v227, %v223
    %v268 = vpack.c.b16 %v232, %v228
    %v269 = vpack.c.b16 %v233, %v229
    %v270 = vpack.c.b16 %v234, %v230
    %v271 = vpack.c.b16 %v235, %v231
    %v272 = vpack.c.b16 %v240, %v236
    %v273 = vpack.c.b16 %v241, %v237
    %v274 = vpack.c.b16 %v242, %v238
    %v275 = vpack.c.b16 %v243, %v239
    %308 = vmatprep.subr.bf16.mxu0 %v273
    %309 = vmatpush1.bf16.msra.mxu0 %v272
    %310 = vmatprep.subr.bf16.mxu0 %v269
    %311 = vmatpush1.bf16.msra.mxu0 %v268
    %312 = vmatprep.subr.bf16.mxu0 %v265
    %313 = vmatpush1.bf16.msra.mxu0 %v264
    %314 = vmatprep.subr.bf16.mxu0 %v261
    %315 = vmatpush1.bf16.msra.mxu0 %v260
    %316 = vmatprep.subr.bf16.mxu0 %v257
    %317 = vmatpush1.bf16.msra.mxu0 %v256
    %318 = vmatprep.subr.bf16.mxu0 %v253
    %319 = vmatpush1.bf16.msra.mxu0 %v252
    %320 = vmatprep.subr.bf16.mxu0 %v249
    %321 = vmatpush1.bf16.msra.mxu0 %v248
    %322 = vmatprep.subr.bf16.mxu0 %v245
    %323 = vmatpush1.bf16.msra.mxu0 %v244
    %324 = vmatprep.subr.bf16.mxu0 0
    %325 = vmatpush2.bf16.msra.mxu0 0
    %326 = vmatprep.subr.bf16.mxu0 0
    %327 = vmatpush2.bf16.msra.mxu0 0
    %328 = vmatprep.subr.bf16.mxu0 0
    %329 = vmatpush2.bf16.msra.mxu0 0
    %330 = vmatprep.subr.bf16.mxu0 0
    %331 = vmatpush2.bf16.msra.mxu0 0
    %332 = vmatprep.subr.bf16.mxu0 0
    %333 = vmatpush2.bf16.msra.mxu0 0
    %334 = vmatprep.subr.bf16.mxu0 0
    %335 = vmatpush2.bf16.msra.mxu0 0
    %336 = vmatprep.subr.bf16.mxu0 0
    %337 = vmatpush2.bf16.msra.mxu0 0
    %338 = vmatprep.subr.bf16.mxu0 0
    %339 = vmatpush2.bf16.msra.mxu0 0
    %340 = vmatprep.mubr.bf16.mxu0 0
    %341 = vmatmul.mubr.bf16.gmra.mxu0 %v80
    %v342 = vpop.f32.mrf.mxu0
    %v343 = vadd.f32 0.0, %v342
    %v344 = vpop.f32.mrf.mxu0
    %v345 = vadd.f32 0.0, %v344
    %v346 = vpop.f32.mrf.mxu0
    %v347 = vpop.f32.mrf.mxu0
    %348 = vdwg.mxu0
    %349 = vmatprep.subr.bf16.mxu0 %v275
    %350 = vmatpush1.bf16.msra.mxu0 %v274
    %351 = vmatprep.subr.bf16.mxu0 %v271
    %352 = vmatpush1.bf16.msra.mxu0 %v270
    %353 = vmatprep.subr.bf16.mxu0 %v267
    %354 = vmatpush1.bf16.msra.mxu0 %v266
    %355 = vmatprep.subr.bf16.mxu0 %v263
    %356 = vmatpush1.bf16.msra.mxu0 %v262
    %357 = vmatprep.subr.bf16.mxu0 %v259
    %358 = vmatpush1.bf16.msra.mxu0 %v258
    %359 = vmatprep.subr.bf16.mxu0 %v255
    %360 = vmatpush1.bf16.msra.mxu0 %v254
    %361 = vmatprep.subr.bf16.mxu0 %v251
    %362 = vmatpush1.bf16.msra.mxu0 %v250
    %363 = vmatprep.subr.bf16.mxu0 %v247
    %364 = vmatpush1.bf16.msra.mxu0 %v246
    %365 = vmatprep.subr.bf16.mxu0 0
    %366 = vmatpush2.bf16.msra.mxu0 0
    %367 = vmatprep.subr.bf16.mxu0 0
    %368 = vmatpush2.bf16.msra.mxu0 0
    %369 = vmatprep.subr.bf16.mxu0 0
    %370 = vmatpush2.bf16.msra.mxu0 0
    %371 = vmatprep.subr.bf16.mxu0 0
    %372 = vmatpush2.bf16.msra.mxu0 0
    %373 = vmatprep.subr.bf16.mxu0 0
    %374 = vmatpush2.bf16.msra.mxu0 0
    %375 = vmatprep.subr.bf16.mxu0 0
    %376 = vmatpush2.bf16.msra.mxu0 0
    %377 = vmatprep.subr.bf16.mxu0 0
    %378 = vmatpush2.bf16.msra.mxu0 0
    %379 = vmatprep.subr.bf16.mxu0 0
    %380 = vmatpush2.bf16.msra.mxu0 0
    %381 = vmatprep.mubr.bf16.mxu0 0
    %382 = vmatmul.mubr.bf16.gmra.mxu0 %v80
    %v383 = vpop.f32.mrf.mxu0
    %v384 = vadd.f32 0.0, %v383
    %v385 = vpop.f32.mrf.mxu0
    %v386 = vadd.f32 0.0, %v385
    %v387 = vpop.f32.mrf.mxu0
    %v388 = vpop.f32.mrf.mxu0
    %389 = vdwg.mxu0
    %v422 = vunpack.c.l.b16 %v83
    %v423 = vunpack.c.h.b16 %v83
    %v424 = vunpack.c.l.b16 %v84
    %v425 = vunpack.c.h.b16 %v84
    %v426 = vunpack.c.l.b16 %v85
    %v427 = vunpack.c.h.b16 %v85
    %v428 = vunpack.c.l.b16 %v86
    %v429 = vunpack.c.h.b16 %v86
    %v430 = vunpack.c.l.b16 %v87
    %v431 = vunpack.c.h.b16 %v87
    %v432 = vunpack.c.l.b16 %v88
    %v433 = vunpack.c.h.b16 %v88
    %v434 = vunpack.c.l.b16 %v89
    %v435 = vunpack.c.h.b16 %v89
    %v436 = vunpack.c.l.b16 %v90
    %v437 = vunpack.c.h.b16 %v90
    %v438 = vunpack.c.l.b16 %v91
    %v439 = vunpack.c.h.b16 %v91
    %v440 = vunpack.c.l.b16 %v92
    %v441 = vunpack.c.h.b16 %v92
    %v442 = vunpack.c.l.b16 %v93
    %v443 = vunpack.c.h.b16 %v93
    %v444 = vunpack.c.l.b16 %v94
    %v445 = vunpack.c.h.b16 %v94
    %v446 = vunpack.c.l.b16 %v95
    %v447 = vunpack.c.h.b16 %v95
    %v448 = vunpack.c.l.b16 %v96
    %v449 = vunpack.c.h.b16 %v96
    %v450 = vunpack.c.l.b16 %v97
    %v451 = vunpack.c.h.b16 %v97
    %v452 = vunpack.c.l.b16 %v98
    %v453 = vunpack.c.h.b16 %v98
    %v454 = vunpack.c.l.b16 %v99
    %v455 = vunpack.c.h.b16 %v99
    %v456 = vunpack.c.l.b16 %v100
    %v457 = vunpack.c.h.b16 %v100
    %v458 = vunpack.c.l.b16 %v101
    %v459 = vunpack.c.h.b16 %v101
    %v460 = vunpack.c.l.b16 %v102
    %v461 = vunpack.c.h.b16 %v102
    %v462 = vunpack.c.l.b16 %v103
    %v463 = vunpack.c.h.b16 %v103
    %v464 = vunpack.c.l.b16 %v104
    %v465 = vunpack.c.h.b16 %v104
    %v466 = vunpack.c.l.b16 %v105
    %v467 = vunpack.c.h.b16 %v105
    %v468 = vunpack.c.l.b16 %v106
    %v469 = vunpack.c.h.b16 %v106
    %v470 = vunpack.c.l.b16 %v107
    %v471 = vunpack.c.h.b16 %v107
    %v472 = vunpack.c.l.b16 %v108
    %v473 = vunpack.c.h.b16 %v108
    %v474 = vunpack.c.l.b16 %v109
    %v475 = vunpack.c.h.b16 %v109
    %v476 = vunpack.c.l.b16 %v110
    %v477 = vunpack.c.h.b16 %v110
    %v478 = vunpack.c.l.b16 %v111
    %v479 = vunpack.c.h.b16 %v111
    %v480 = vunpack.c.l.b16 %v112
    %v481 = vunpack.c.h.b16 %v112
    %v482 = vunpack.c.l.b16 %v113
    %v483 = vunpack.c.h.b16 %v113
    %v484 = vunpack.c.l.b16 %v114
    %v485 = vunpack.c.h.b16 %v114
    %v486 = vpack.c.b16 %v426, %v422
    %v487 = vpack.c.b16 %v427, %v423
    %v488 = vpack.c.b16 %v428, %v424
    %v489 = vpack.c.b16 %v429, %v425
    %v490 = vpack.c.b16 %v434, %v430
    %v491 = vpack.c.b16 %v435, %v431
    %v492 = vpack.c.b16 %v436, %v432
    %v493 = vpack.c.b16 %v437, %v433
    %v494 = vpack.c.b16 %v442, %v438
    %v495 = vpack.c.b16 %v443, %v439
    %v496 = vpack.c.b16 %v444, %v440
    %v497 = vpack.c.b16 %v445, %v441
    %v498 = vpack.c.b16 %v450, %v446
    %v499 = vpack.c.b16 %v451, %v447
    %v500 = vpack.c.b16 %v452, %v448
    %v501 = vpack.c.b16 %v453, %v449
    %v502 = vpack.c.b16 %v458, %v454
    %v503 = vpack.c.b16 %v459, %v455
    %v504 = vpack.c.b16 %v460, %v456
    %v505 = vpack.c.b16 %v461, %v457
    %v506 = vpack.c.b16 %v466, %v462
    %v507 = vpack.c.b16 %v467, %v463
    %v508 = vpack.c.b16 %v468, %v464
    %v509 = vpack.c.b16 %v469, %v465
    %v510 = vpack.c.b16 %v474, %v470
    %v511 = vpack.c.b16 %v475, %v471
    %v512 = vpack.c.b16 %v476, %v472
    %v513 = vpack.c.b16 %v477, %v473
    %v514 = vpack.c.b16 %v482, %v478
    %v515 = vpack.c.b16 %v483, %v479
    %v516 = vpack.c.b16 %v484, %v480
    %v517 = vpack.c.b16 %v485, %v481
    %550 = vmatprep.subr.bf16.mxu0 %v515
    %551 = vmatpush1.bf16.msra.mxu0 %v514
    %552 = vmatprep.subr.bf16.mxu0 %v511
    %553 = vmatpush1.bf16.msra.mxu0 %v510
    %554 = vmatprep.subr.bf16.mxu0 %v507
    %555 = vmatpush1.bf16.msra.mxu0 %v506
    %556 = vmatprep.subr.bf16.mxu0 %v503
    %557 = vmatpush1.bf16.msra.mxu0 %v502
    %558 = vmatprep.subr.bf16.mxu0 %v499
    %559 = vmatpush1.bf16.msra.mxu0 %v498
    %560 = vmatprep.subr.bf16.mxu0 %v495
    %561 = vmatpush1.bf16.msra.mxu0 %v494
    %562 = vmatprep.subr.bf16.mxu0 %v491
    %563 = vmatpush1.bf16.msra.mxu0 %v490
    %564 = vmatprep.subr.bf16.mxu0 %v487
    %565 = vmatpush1.bf16.msra.mxu0 %v486
    %566 = vmatprep.subr.bf16.mxu0 0
    %567 = vmatpush2.bf16.msra.mxu0 0
    %568 = vmatprep.subr.bf16.mxu0 0
    %569 = vmatpush2.bf16.msra.mxu0 0
    %570 = vmatprep.subr.bf16.mxu0 0
    %571 = vmatpush2.bf16.msra.mxu0 0
    %572 = vmatprep.subr.bf16.mxu0 0
    %573 = vmatpush2.bf16.msra.mxu0 0
    %574 = vmatprep.subr.bf16.mxu0 0
    %575 = vmatpush2.bf16.msra.mxu0 0
    %576 = vmatprep.subr.bf16.mxu0 0
    %577 = vmatpush2.bf16.msra.mxu0 0
    %578 = vmatprep.subr.bf16.mxu0 0
    %579 = vmatpush2.bf16.msra.mxu0 0
    %580 = vmatprep.subr.bf16.mxu0 0
    %581 = vmatpush2.bf16.msra.mxu0 0
    %582 = vmatprep.mubr.bf16.mxu0 0
    %583 = vmatmul.mubr.bf16.gmra.mxu0 %v78
    %v584 = vpop.f32.mrf.mxu0
    %v585 = vadd.f32 %v343, %v584
    %v586 = vpop.f32.mrf.mxu0
    %v587 = vadd.f32 %v345, %v586
    %v588 = vpop.f32.mrf.mxu0
    %v589 = vpop.f32.mrf.mxu0
    %590 = vdwg.mxu0
    %591 = vmatprep.subr.bf16.mxu0 %v517
    %592 = vmatpush1.bf16.msra.mxu0 %v516
    %593 = vmatprep.subr.bf16.mxu0 %v513
    %594 = vmatpush1.bf16.msra.mxu0 %v512
    %595 = vmatprep.subr.bf16.mxu0 %v509
    %596 = vmatpush1.bf16.msra.mxu0 %v508
    %597 = vmatprep.subr.bf16.mxu0 %v505
    %598 = vmatpush1.bf16.msra.mxu0 %v504
    %599 = vmatprep.subr.bf16.mxu0 %v501
    %600 = vmatpush1.bf16.msra.mxu0 %v500
    %601 = vmatprep.subr.bf16.mxu0 %v497
    %602 = vmatpush1.bf16.msra.mxu0 %v496
    %603 = vmatprep.subr.bf16.mxu0 %v493
    %604 = vmatpush1.bf16.msra.mxu0 %v492
    %605 = vmatprep.subr.bf16.mxu0 %v489
    %606 = vmatpush1.bf16.msra.mxu0 %v488
    %607 = vmatprep.subr.bf16.mxu0 0
    %608 = vmatpush2.bf16.msra.mxu0 0
    %609 = vmatprep.subr.bf16.mxu0 0
    %610 = vmatpush2.bf16.msra.mxu0 0
    %611 = vmatprep.subr.bf16.mxu0 0
    %612 = vmatpush2.bf16.msra.mxu0 0
    %613 = vmatprep.subr.bf16.mxu0 0
    %614 = vmatpush2.bf16.msra.mxu0 0
    %615 = vmatprep.subr.bf16.mxu0 0
    %616 = vmatpush2.bf16.msra.mxu0 0
    %617 = vmatprep.subr.bf16.mxu0 0
    %618 = vmatpush2.bf16.msra.mxu0 0
    %619 = vmatprep.subr.bf16.mxu0 0
    %620 = vmatpush2.bf16.msra.mxu0 0
    %621 = vmatprep.subr.bf16.mxu0 0
    %622 = vmatpush2.bf16.msra.mxu0 0
    %623 = vmatprep.mubr.bf16.mxu0 0
    %624 = vmatmul.mubr.bf16.gmra.mxu0 %v78
    %v625 = vpop.f32.mrf.mxu0
    %v626 = vadd.f32 %v384, %v625
    %v627 = vpop.f32.mrf.mxu0
    %v628 = vadd.f32 %v386, %v627
    %v629 = vpop.f32.mrf.mxu0
    %v630 = vpop.f32.mrf.mxu0
    %631 = vdwg.mxu0
    %s632 = scalar_lea.vmem [#allocation8], 512
    %v633 = vld [vmem:[%s632] sm:$0xff]
    %v634 = vld [vmem:[%s632 + $0x8] sm:$0xff]
    %v635 = vld [vmem:[%s632 + $0x10] sm:$0xff]
    %v636 = vld [vmem:[%s632 + $0x18] sm:$0xff]
    %v637 = vld [vmem:[%s632 + $0x20] sm:$0xff]
    %v638 = vld [vmem:[%s632 + $0x28] sm:$0xff]
    %v639 = vld [vmem:[%s632 + $0x30] sm:$0xff]
    %v640 = vld [vmem:[%s632 + $0x38] sm:$0xff]
    %v641 = vld [vmem:[%s632 + $0x40] sm:$0xff]
    %v642 = vld [vmem:[%s632 + $0x48] sm:$0xff]
    %v643 = vld [vmem:[%s632 + $0x50] sm:$0xff]
    %v644 = vld [vmem:[%s632 + $0x58] sm:$0xff]
    %v645 = vld [vmem:[%s632 + $0x60] sm:$0xff]
    %v646 = vld [vmem:[%s632 + $0x68] sm:$0xff]
    %v647 = vld [vmem:[%s632 + $0x70] sm:$0xff]
    %v648 = vld [vmem:[%s632 + $0x78] sm:$0xff]
    %v649 = vld [vmem:[%s632 + $0x80] sm:$0xff]
    %v650 = vld [vmem:[%s632 + $0x88] sm:$0xff]
    %v651 = vld [vmem:[%s632 + $0x90] sm:$0xff]
    %v652 = vld [vmem:[%s632 + $0x98] sm:$0xff]
    %v653 = vld [vmem:[%s632 + $0xa0] sm:$0xff]
    %v654 = vld [vmem:[%s632 + $0xa8] sm:$0xff]
    %v655 = vld [vmem:[%s632 + $0xb0] sm:$0xff]
    %v656 = vld [vmem:[%s632 + $0xb8] sm:$0xff]
    %v657 = vld [vmem:[%s632 + $0xc0] sm:$0xff]
    %v658 = vld [vmem:[%s632 + $0xc8] sm:$0xff]
    %v659 = vld [vmem:[%s632 + $0xd0] sm:$0xff]
    %v660 = vld [vmem:[%s632 + $0xd8] sm:$0xff]
    %v661 = vld [vmem:[%s632 + $0xe0] sm:$0xff]
    %v662 = vld [vmem:[%s632 + $0xe8] sm:$0xff]
    %v663 = vld [vmem:[%s632 + $0xf0] sm:$0xff]
    %v664 = vld [vmem:[%s632 + $0xf8] sm:$0xff]
    %v697 = vunpack.c.l.b16 %v633
    %v698 = vunpack.c.h.b16 %v633
    %v699 = vunpack.c.l.b16 %v634
    %v700 = vunpack.c.h.b16 %v634
    %v701 = vunpack.c.l.b16 %v635
    %v702 = vunpack.c.h.b16 %v635
    %v703 = vunpack.c.l.b16 %v636
    %v704 = vunpack.c.h.b16 %v636
    %v705 = vunpack.c.l.b16 %v637
    %v706 = vunpack.c.h.b16 %v637
    %v707 = vunpack.c.l.b16 %v638
    %v708 = vunpack.c.h.b16 %v638
    %v709 = vunpack.c.l.b16 %v639
    %v710 = vunpack.c.h.b16 %v639
    %v711 = vunpack.c.l.b16 %v640
    %v712 = vunpack.c.h.b16 %v640
    %v713 = vunpack.c.l.b16 %v641
    %v714 = vunpack.c.h.b16 %v641
    %v715 = vunpack.c.l.b16 %v642
    %v716 = vunpack.c.h.b16 %v642
    %v717 = vunpack.c.l.b16 %v643
    %v718 = vunpack.c.h.b16 %v643
    %v719 = vunpack.c.l.b16 %v644
    %v720 = vunpack.c.h.b16 %v644
    %v721 = vunpack.c.l.b16 %v645
    %v722 = vunpack.c.h.b16 %v645
    %v723 = vunpack.c.l.b16 %v646
    %v724 = vunpack.c.h.b16 %v646
    %v725 = vunpack.c.l.b16 %v647
    %v726 = vunpack.c.h.b16 %v647
    %v727 = vunpack.c.l.b16 %v648
    %v728 = vunpack.c.h.b16 %v648
    %v729 = vunpack.c.l.b16 %v649
    %v730 = vunpack.c.h.b16 %v649
    %v731 = vunpack.c.l.b16 %v650
    %v732 = vunpack.c.h.b16 %v650
    %v733 = vunpack.c.l.b16 %v651
    %v734 = vunpack.c.h.b16 %v651
    %v735 = vunpack.c.l.b16 %v652
    %v736 = vunpack.c.h.b16 %v652
    %v737 = vunpack.c.l.b16 %v653
    %v738 = vunpack.c.h.b16 %v653
    %v739 = vunpack.c.l.b16 %v654
    %v740 = vunpack.c.h.b16 %v654
    %v741 = vunpack.c.l.b16 %v655
    %v742 = vunpack.c.h.b16 %v655
    %v743 = vunpack.c.l.b16 %v656
    %v744 = vunpack.c.h.b16 %v656
    %v745 = vunpack.c.l.b16 %v657
    %v746 = vunpack.c.h.b16 %v657
    %v747 = vunpack.c.l.b16 %v658
    %v748 = vunpack.c.h.b16 %v658
    %v749 = vunpack.c.l.b16 %v659
    %v750 = vunpack.c.h.b16 %v659
    %v751 = vunpack.c.l.b16 %v660
    %v752 = vunpack.c.h.b16 %v660
    %v753 = vunpack.c.l.b16 %v661
    %v754 = vunpack.c.h.b16 %v661
    %v755 = vunpack.c.l.b16 %v662
    %v756 = vunpack.c.h.b16 %v662
    %v757 = vunpack.c.l.b16 %v663
    %v758 = vunpack.c.h.b16 %v663
    %v759 = vunpack.c.l.b16 %v664
    %v760 = vunpack.c.h.b16 %v664
    %v761 = vpack.c.b16 %v701, %v697
    %v762 = vpack.c.b16 %v702, %v698
    %v763 = vpack.c.b16 %v703, %v699
    %v764 = vpack.c.b16 %v704, %v700
    %v765 = vpack.c.b16 %v709, %v705
    %v766 = vpack.c.b16 %v710, %v706
    %v767 = vpack.c.b16 %v711, %v707
    %v768 = vpack.c.b16 %v712, %v708
    %v769 = vpack.c.b16 %v717, %v713
    %v770 = vpack.c.b16 %v718, %v714
    %v771 = vpack.c.b16 %v719, %v715
    %v772 = vpack.c.b16 %v720, %v716
    %v773 = vpack.c.b16 %v725, %v721
    %v774 = vpack.c.b16 %v726, %v722
    %v775 = vpack.c.b16 %v727, %v723
    %v776 = vpack.c.b16 %v728, %v724
    %v777 = vpack.c.b16 %v733, %v729
    %v778 = vpack.c.b16 %v734, %v730
    %v779 = vpack.c.b16 %v735, %v731
    %v780 = vpack.c.b16 %v736, %v732
    %v781 = vpack.c.b16 %v741, %v737
    %v782 = vpack.c.b16 %v742, %v738
    %v783 = vpack.c.b16 %v743, %v739
    %v784 = vpack.c.b16 %v744, %v740
    %v785 = vpack.c.b16 %v749, %v745
    %v786 = vpack.c.b16 %v750, %v746
    %v787 = vpack.c.b16 %v751, %v747
    %v788 = vpack.c.b16 %v752, %v748
    %v789 = vpack.c.b16 %v757, %v753
    %v790 = vpack.c.b16 %v758, %v754
    %v791 = vpack.c.b16 %v759, %v755
    %v792 = vpack.c.b16 %v760, %v756
    %825 = vmatprep.subr.bf16.mxu0 %v790
    %826 = vmatpush1.bf16.msra.mxu0 %v789
    %827 = vmatprep.subr.bf16.mxu0 %v786
    %828 = vmatpush1.bf16.msra.mxu0 %v785
    %829 = vmatprep.subr.bf16.mxu0 %v782
    %830 = vmatpush1.bf16.msra.mxu0 %v781
    %831 = vmatprep.subr.bf16.mxu0 %v778
    %832 = vmatpush1.bf16.msra.mxu0 %v777
    %833 = vmatprep.subr.bf16.mxu0 %v774
    %834 = vmatpush1.bf16.msra.mxu0 %v773
    %835 = vmatprep.subr.bf16.mxu0 %v770
    %836 = vmatpush1.bf16.msra.mxu0 %v769
    %837 = vmatprep.subr.bf16.mxu0 %v766
    %838 = vmatpush1.bf16.msra.mxu0 %v765
    %839 = vmatprep.subr.bf16.mxu0 %v762
    %840 = vmatpush1.bf16.msra.mxu0 %v761
    %841 = vmatprep.subr.bf16.mxu0 0
    %842 = vmatpush2.bf16.msra.mxu0 0
    %843 = vmatprep.subr.bf16.mxu0 0
    %844 = vmatpush2.bf16.msra.mxu0 0
    %845 = vmatprep.subr.bf16.mxu0 0
    %846 = vmatpush2.bf16.msra.mxu0 0
    %847 = vmatprep.subr.bf16.mxu0 0
    %848 = vmatpush2.bf16.msra.mxu0 0
    %849 = vmatprep.subr.bf16.mxu0 0
    %850 = vmatpush2.bf16.msra.mxu0 0
    %851 = vmatprep.subr.bf16.mxu0 0
    %852 = vmatpush2.bf16.msra.mxu0 0
    %853 = vmatprep.subr.bf16.mxu0 0
    %854 = vmatpush2.bf16.msra.mxu0 0
    %855 = vmatprep.subr.bf16.mxu0 0
    %856 = vmatpush2.bf16.msra.mxu0 0
    %857 = vmatprep.mubr.bf16.mxu0 0
    %858 = vmatmul.mubr.bf16.gmra.mxu0 %v82
    %v859 = vpop.f32.mrf.mxu0
    %v860 = vadd.f32 0.0, %v859
    %v861 = vpop.f32.mrf.mxu0
    %v862 = vadd.f32 0.0, %v861
    %v863 = vpop.f32.mrf.mxu0
    %v864 = vpop.f32.mrf.mxu0
    %865 = vdwg.mxu0
    %866 = vmatprep.subr.bf16.mxu0 %v792
    %867 = vmatpush1.bf16.msra.mxu0 %v791
    %868 = vmatprep.subr.bf16.mxu0 %v788
    %869 = vmatpush1.bf16.msra.mxu0 %v787
    %870 = vmatprep.subr.bf16.mxu0 %v784
    %871 = vmatpush1.bf16.msra.mxu0 %v783
    %872 = vmatprep.subr.bf16.mxu0 %v780
    %873 = vmatpush1.bf16.msra.mxu0 %v779
    %874 = vmatprep.subr.bf16.mxu0 %v776
    %875 = vmatpush1.bf16.msra.mxu0 %v775
    %876 = vmatprep.subr.bf16.mxu0 %v772
    %877 = vmatpush1.bf16.msra.mxu0 %v771
    %878 = vmatprep.subr.bf16.mxu0 %v768
    %879 = vmatpush1.bf16.msra.mxu0 %v767
    %880 = vmatprep.subr.bf16.mxu0 %v764
    %881 = vmatpush1.bf16.msra.mxu0 %v763
    %882 = vmatprep.subr.bf16.mxu0 0
    %883 = vmatpush2.bf16.msra.mxu0 0
    %884 = vmatprep.subr.bf16.mxu0 0
    %885 = vmatpush2.bf16.msra.mxu0 0
    %886 = vmatprep.subr.bf16.mxu0 0
    %887 = vmatpush2.bf16.msra.mxu0 0
    %888 = vmatprep.subr.bf16.mxu0 0
    %889 = vmatpush2.bf16.msra.mxu0 0
    %890 = vmatprep.subr.bf16.mxu0 0
    %891 = vmatpush2.bf16.msra.mxu0 0
    %892 = vmatprep.subr.bf16.mxu0 0
    %893 = vmatpush2.bf16.msra.mxu0 0
    %894 = vmatprep.subr.bf16.mxu0 0
    %895 = vmatpush2.bf16.msra.mxu0 0
    %896 = vmatprep.subr.bf16.mxu0 0
    %897 = vmatpush2.bf16.msra.mxu0 0
    %898 = vmatprep.mubr.bf16.mxu0 0
    %899 = vmatmul.mubr.bf16.gmra.mxu0 %v82
    %v900 = vpop.f32.mrf.mxu0
    %v901 = vadd.f32 0.0, %v900
    %v902 = vpop.f32.mrf.mxu0
    %v903 = vadd.f32 0.0, %v902
    %v904 = vpop.f32.mrf.mxu0
    %v905 = vpop.f32.mrf.mxu0
    %906 = vdwg.mxu0
    %v907 = vadd.f32 %v585, %v860
    %v908 = vadd.f32 %v587, %v862
    %v909 = vadd.f32 %v626, %v901
    %v910 = vadd.f32 %v628, %v903
    %v911 = vld [vmem:[%s4] sm:$0xf]
    %v913 = vlaneseq
    %v914 = vshrl.u32 %v913, 7
    %v915 = vsub.s32 0, %v914
    %v916 = vrot.slane %v911, %v915
    %v917 = vlaneseq
    %v918 = vshrl.u32 %v917, 7
    %v919 = vsub.s32 1, %v918
    %v920 = vrot.slane %v911, %v919
    %v921 = vlaneseq
    %v922 = vshrl.u32 %v921, 7
    %v923 = vsub.s32 2, %v922
    %v924 = vrot.slane %v911, %v923
    %v925 = vlaneseq
    %v926 = vshrl.u32 %v925, 7
    %v927 = vsub.s32 3, %v926
    %v928 = vrot.slane %v911, %v927
    %v933 = vadd.f32 %v907, %v916
    %v934 = vadd.f32 %v908, %v920
    %v935 = vadd.f32 %v909, %v924
    %v936 = vadd.f32 %v910, %v928
    %v937 = vmax.f32 %v933, 0.0
    %v938 = vmax.f32 %v934, 0.0
    %v939 = vmax.f32 %v935, 0.0
    %v940 = vmax.f32 %v936, 0.0
    %v941 = vld [vmem:[%s5] sm:$0xf]
    %v943 = vlaneseq
    %v944 = vshrl.u32 %v943, 7
    %v945 = vsub.s32 0, %v944
    %v946 = vrot.slane %v941, %v945
    %v947 = vlaneseq
    %v948 = vshrl.u32 %v947, 7
    %v949 = vsub.s32 1, %v948
    %v950 = vrot.slane %v941, %v949
    %v951 = vlaneseq
    %v952 = vshrl.u32 %v951, 7
    %v953 = vsub.s32 2, %v952
    %v954 = vrot.slane %v941, %v953
    %v955 = vlaneseq
    %v956 = vshrl.u32 %v955, 7
    %v957 = vsub.s32 3, %v956
    %v958 = vrot.slane %v941, %v957
    %v963 = vmul.f32 %v937, %v946
    %v964 = vmul.f32 %v938, %v950
    %v965 = vmul.f32 %v939, %v954
    %v966 = vmul.f32 %v940, %v958
    %v967 = vadd.f32 %v963, %v964
    %v968 = vadd.f32 %v967, %v965
    %v969 = vadd.f32 %v968, %v966
    %970 = vadd.xlane.f32.xlu0 %v969
    %v971 = vpop.xlane.xlu0 %970
    %s972 = sld [smem:[#allocation2]]
    %v973 = vstv %s972
    %v974 = vadd.f32 %v971, %v973
    %vm975 = vcmask 7168
    %976 = vst.msk [vmem:[%s7] sm:$0xff] %vm975, %v974
    // Predicated region
    $region46: #{tpu_custom_call.1} parent=1 // pred_check
      _
    $region47: #{tpu_custom_call.1} parent=1 // pred_check_branch
      %978 = sbr.rel (0) target = $region49
    $region48: #{tpu_custom_call.1} parent=1 // pred_region
      _
    $region49: #{tpu_custom_call.1} parent=1 // pred_fallthru
      _
    // Predicated region
    $region50: #{tpu_custom_call.1} parent=1 // pred_check
      _
    $region51: #{tpu_custom_call.1} parent=1 // pred_check_branch
      %980 = sbr.rel (0) target = $region53
    $region52: #{tpu_custom_call.1} parent=1 // pred_region
      _
    $region53: #{tpu_custom_call.1} parent=1 // pred_fallthru
      _
    %981 = vsyncpa [#allocation4], 1
    %982 = vsyncpa [#allocation6], 1
    %983 = vsyncpa [#allocation9], 1

</llo_original>
